<compile_context>
chip_gen: v5e
topology: v5e:2x2
jax: 0.10.0
libtpu: 0.0.40
codegen_flags: <defaults>
</compile_context>

<pallas_src>
import functools

import numpy as np
import jax
import jax.numpy as jnp
from jax.experimental import pallas as pl
from jax.experimental.pallas import tpu as pltpu


def _lstm_critic_kernel(x_ref, h0_ref, c0_ref, wih_ref, whh_ref, b_ref,
                        wfc_ref, bfc_ref,
                        q_ref, hn_ref, cn_ref,
                        *, seq_len, batch_pad, hidden_dim):
    """Single grid step runs the whole sequence.

    x_ref   : (T*Bp, Din)  time-major, batch-padded inputs
    wih_ref : (Din, 4H)    W_ih^T, i/f/o columns pre-scaled by 0.5
    whh_ref : (H, 4H)      W_hh^T, i/f/o columns pre-scaled by 0.5
    b_ref   : (1, 4H)      b_ih + b_hh, i/f/o entries pre-scaled by 0.5
    q_ref   : (Bp, T)      Q values (time on lanes), written once
    hn_ref  : (Bp, H)      final hidden state
    cn_ref  : (Bp, H)      final cell state
    """
    T, Bp, H = seq_len, batch_pad, hidden_dim

    # ---- Phase 0: input projection for ALL timesteps, one MXU matmul.
    # Kept as a value (T*Bp x 4H f32 = 8 vregs at the test shape).
    xproj = jnp.dot(x_ref[...], wih_ref[...],
                    preferred_element_type=jnp.float32) + b_ref[...]

    whh = whh_ref[...]          # (H, 4H), loaded once, stays resident
    wfc = wfc_ref[...]          # (1, H)
    bfc = bfc_ref[...]          # (1, 1)
    lane_t = jax.lax.broadcasted_iota(jnp.int32, (1, T), 1)   # lane index 0..T-1

    h = h0_ref[...].astype(jnp.float32)
    c = c0_ref[...].astype(jnp.float32)
    q_acc = jnp.zeros((Bp, T), jnp.float32)

    # ---- Phase 1: serial recurrence (only h @ W_hh^T on the MXU per step).
    # T is small & static -> full static unroll (straight-line code).
    for t in range(T):
        gates = xproj[t * Bp:(t + 1) * Bp, :] + jnp.dot(
            h, whh, preferred_element_type=jnp.float32)         # (Bp, 4H)
        # ONE full-width tanh for all four gates; sigmoid(z)=0.5*tanh(z/2)+0.5
        # (the /2 was folded into the weights in the wrapper).
        th = jnp.tanh(gates)
        i = 0.5 * th[:, 0 * H:1 * H] + 0.5
        f = 0.5 * th[:, 1 * H:2 * H] + 0.5
        g = th[:, 2 * H:3 * H]
        o = 0.5 * th[:, 3 * H:4 * H] + 0.5
        c = f * c + i * g
        h = o * jnp.tanh(c)
        # Fused FC head: VPU mul + cross-lane reduce on otherwise idle slots.
        q_t = jnp.sum(h * wfc, axis=-1, keepdims=True) + bfc     # (Bp, 1)
        q_acc = jnp.where(lane_t == t, q_t, q_acc)                # pack lane t

    # ---- Phase 2: single writes of all outputs.
    q_ref[...] = q_acc.astype(q_ref.dtype)
    hn_ref[...] = h.astype(hn_ref.dtype)
    cn_ref[...] = c.astype(cn_ref.dtype)


def critic_forward(params, states, actions, hidden=None):
    """states: (B, T, S) f32, actions: (B, T, A) f32.
    Returns (q_values (B, T, 1), (h_n (1, B, H), c_n (1, B, H)))."""
    B, T, S = states.shape
    A = actions.shape[2]
    Din = S + A
    H = params["w_hh"].shape[1]              # w_hh: (4H, H)
    Bp = ((B + 7) // 8) * 8                  # pad batch to sublane count

    xu = jnp.concatenate([states, actions], axis=2).astype(jnp.float32)  # (B,T,Din)
    xu_tm = jnp.transpose(xu, (1, 0, 2))                                  # (T,B,Din)
    xu_tm = jnp.pad(xu_tm, ((0, 0), (0, Bp - B), (0, 0)))                 # (T,Bp,Din)
    x2d = xu_tm.reshape(T * Bp, Din)

    if hidden is None:
        h0 = jnp.zeros((Bp, H), jnp.float32)
        c0 = jnp.zeros((Bp, H), jnp.float32)
    else:
        h0 = jnp.pad(hidden[0].reshape(B, H).astype(jnp.float32),
                     ((0, Bp - B), (0, 0)))
        c0 = jnp.pad(hidden[1].reshape(B, H).astype(jnp.float32),
                     ((0, Bp - B), (0, 0)))

    # tanh-only gate trick: scale i/f/o gate columns of the pre-activations
    # by 0.5 (folded into weights+bias, zero in-kernel cost).
    col_scale = np.ones((4 * H,), np.float32)
    col_scale[0 * H:2 * H] = 0.5   # i, f
    col_scale[3 * H:4 * H] = 0.5   # o
    w_ih_t = (jnp.transpose(params["w_ih"]).astype(jnp.float32) * col_scale)  # (Din,4H)
    w_hh_t = (jnp.transpose(params["w_hh"]).astype(jnp.float32) * col_scale)  # (H,4H)
    bias = ((params["b_ih"] + params["b_hh"]).astype(jnp.float32)
            * col_scale).reshape(1, 4 * H)
    w_fc_row = params["w_fc"].reshape(1, H).astype(jnp.float32)   # (1, H)
    b_fc = params["b_fc"].reshape(1, 1).astype(jnp.float32)       # (1, 1)

    kernel = functools.partial(_lstm_critic_kernel,
                               seq_len=T, batch_pad=Bp, hidden_dim=H)

    full2 = lambda i: (0, 0)
    q2d, h_n, c_n = pl.pallas_call(
        kernel,
        out_shape=(
            jax.ShapeDtypeStruct((Bp, T), jnp.float32),   # q, time on lanes
            jax.ShapeDtypeStruct((Bp, H), jnp.float32),   # h_n
            jax.ShapeDtypeStruct((Bp, H), jnp.float32),   # c_n
        ),
        grid_spec=pltpu.PrefetchScalarGridSpec(
            num_scalar_prefetch=0,
            grid=(1,),
            in_specs=[
                pl.BlockSpec((T * Bp, Din), full2),    # x (time-major, padded)
                pl.BlockSpec((Bp, H), full2),          # h0
                pl.BlockSpec((Bp, H), full2),          # c0
                pl.BlockSpec((Din, 4 * H), full2),     # W_ih^T (scaled)
                pl.BlockSpec((H, 4 * H), full2),       # W_hh^T (scaled)
                pl.BlockSpec((1, 4 * H), full2),       # bias   (scaled)
                pl.BlockSpec((1, H), full2),           # W_fc row
                pl.BlockSpec((1, 1), full2),           # b_fc
            ],
            out_specs=[
                pl.BlockSpec((Bp, T), full2),
                pl.BlockSpec((Bp, H), full2),
                pl.BlockSpec((Bp, H), full2),
            ],
        ),
        compiler_params=pltpu.CompilerParams(
            dimension_semantics=("arbitrary",)),
    )(x2d, h0, c0, w_ih_t, w_hh_t, bias, w_fc_row, b_fc)

    q_values = q2d[:B, :, None]                       # (B, T, 1), no transpose
    return q_values, (h_n[None, :B, :], c_n[None, :B, :])


def init_params(key, state_dim, action_dim, hidden_dim):
    """Deterministic init mirroring PyTorch shapes (uniform +/- 1/sqrt(H))."""
    din = state_dim + action_dim
    k = 1.0 / jnp.sqrt(jnp.float32(hidden_dim))
    keys = jax.random.split(key, 6)
    u = lambda kk, shape: jax.random.uniform(kk, shape, jnp.float32, -k, k)
    return {
        "w_ih": u(keys[0], (4 * hidden_dim, din)),
        "w_hh": u(keys[1], (4 * hidden_dim, hidden_dim)),
        "b_ih": u(keys[2], (4 * hidden_dim,)),
        "b_hh": u(keys[3], (4 * hidden_dim,)),
        "w_fc": u(keys[4], (1, hidden_dim)),
        "b_fc": u(keys[5], (1,)),
    }


def _reference_forward(params, states, actions):
    """Pure-JAX reference (lax.scan LSTM) for correctness check."""
    B, T, S = states.shape
    H = params["w_hh"].shape[1]
    xu = jnp.concatenate([states, actions], axis=2).astype(jnp.float32)
    w_ih, w_hh = params["w_ih"], params["w_hh"]
    b = params["b_ih"] + params["b_hh"]

    def step(carry, x_t):
        h, c = carry
        gates = x_t @ w_ih.T + h @ w_hh.T + b
        i, f, g, o = jnp.split(gates, 4, axis=-1)
        i, f, o = jax.nn.sigmoid(i), jax.nn.sigmoid(f), jax.nn.sigmoid(o)
        g = jnp.tanh(g)
        c = f * c + i * g
        h = o * jnp.tanh(c)
        return (h, c), h

    init = (jnp.zeros((B, H), jnp.float32), jnp.zeros((B, H), jnp.float32))
    (h_n, c_n), hs = jax.lax.scan(step, init, jnp.transpose(xu, (1, 0, 2)))
    lstm_out = jnp.transpose(hs, (1, 0, 2))
    q = lstm_out @ params["w_fc"].T + params["b_fc"]
    return q, (h_n[None], c_n[None])


if __name__ == "__main__":
    B, T = 2, 8
    state_dim, action_dim, hidden_dim = 12, 4, 32

    key = jax.random.PRNGKey(0)
    k_params, k_s, k_a = jax.random.split(key, 3)
    params = init_params(k_params, state_dim, action_dim, hidden_dim)

    states = jax.random.normal(k_s, (B, T, state_dim), jnp.float32)
    actions = jax.random.normal(k_a, (B, T, action_dim), jnp.float32)

    # jit the whole forward so the tiny pre/post-processing fuses into one
    # XLA program (dispatch overhead was the dominant wall-clock cost).
    forward = jax.jit(critic_forward)
    q, (h_n, c_n) = forward(params, states, actions)
    jax.block_until_ready((q, h_n, c_n))

    q_ref, (h_ref, c_ref) = _reference_forward(params, states, actions)
    assert q.shape == (B, T, 1) and h_n.shape == (1, B, hidden_dim)
    assert jnp.allclose(q, q_ref, atol=1e-4, rtol=1e-4)
    assert jnp.allclose(h_n, h_ref, atol=1e-4, rtol=1e-4)
    assert jnp.allclose(c_n, c_ref, atol=1e-4, rtol=1e-4)

    print("KERNEL_OK")
</pallas_src>

<mosaic_0001>
module attributes {stable_mosaic.version = 11 : i64} {
  func.func @_lstm_critic_kernel(%arg0: i32, %arg1: memref<64x16xf32, #tpu.memory_space<vmem>>, %arg2: memref<8x32xf32, #tpu.memory_space<vmem>>, %arg3: memref<8x32xf32, #tpu.memory_space<vmem>>, %arg4: memref<16x128xf32, #tpu.memory_space<vmem>>, %arg5: memref<32x128xf32, #tpu.memory_space<vmem>>, %arg6: memref<1x128xf32, #tpu.memory_space<vmem>>, %arg7: memref<1x32xf32, #tpu.memory_space<vmem>>, %arg8: memref<1x1xf32, #tpu.memory_space<vmem>>, %arg9: memref<8x8xf32, #tpu.memory_space<vmem>>, %arg10: memref<8x32xf32, #tpu.memory_space<vmem>>, %arg11: memref<8x32xf32, #tpu.memory_space<vmem>>) attributes {dimension_semantics = [#tpu.dimension_semantics<arbitrary>], iteration_bounds = array<i64: 1>, scalar_prefetch = 0 : i64, scratch_operands = 0 : i64, tpu.core_type = #tpu.core_type<tc>, window_params = [{pipeline_mode = #tpu.pipeline_mode<synchronous>, transform_indices = @transform_0, window_bounds = array<i64: 64, 16>}, {pipeline_mode = #tpu.pipeline_mode<synchronous>, transform_indices = @transform_1, window_bounds = array<i64: 8, 32>}, {pipeline_mode = #tpu.pipeline_mode<synchronous>, transform_indices = @transform_2, window_bounds = array<i64: 8, 32>}, {pipeline_mode = #tpu.pipeline_mode<synchronous>, transform_indices = @transform_3, window_bounds = array<i64: 16, 128>}, {pipeline_mode = #tpu.pipeline_mode<synchronous>, transform_indices = @transform_4, window_bounds = array<i64: 32, 128>}, {pipeline_mode = #tpu.pipeline_mode<synchronous>, transform_indices = @transform_5, window_bounds = array<i64: 1, 128>}, {pipeline_mode = #tpu.pipeline_mode<synchronous>, transform_indices = @transform_6, window_bounds = array<i64: 1, 32>}, {pipeline_mode = #tpu.pipeline_mode<synchronous>, transform_indices = @transform_7, window_bounds = array<i64: 1, 1>}, {pipeline_mode = #tpu.pipeline_mode<synchronous>, transform_indices = @transform_8, window_bounds = array<i64: 8, 8>}, {pipeline_mode = #tpu.pipeline_mode<synchronous>, transform_indices = @transform_9, window_bounds = array<i64: 8, 32>}, {pipeline_mode = #tpu.pipeline_mode<synchronous>, transform_indices = @transform_10, window_bounds = array<i64: 8, 32>}]} {
    %c0 = arith.constant 0 : index
    %c0_0 = arith.constant 0 : index
    %0 = vector.load %arg1[%c0, %c0_0] : memref<64x16xf32, #tpu.memory_space<vmem>>, vector<64x16xf32>
    %c0_1 = arith.constant 0 : index
    %c0_2 = arith.constant 0 : index
    %1 = vector.load %arg4[%c0_1, %c0_2] : memref<16x128xf32, #tpu.memory_space<vmem>>, vector<16x128xf32>
    %cst = arith.constant dense<0.000000e+00> : vector<64x128xf32>
    %2 = tpu.matmul %0, %1, %cst {dimension_numbers = #tpu.dot_dimension_numbers<[1], [0], [0], [1], [0, 0, 1, 1], [], []>} : vector<64x16xf32>, vector<16x128xf32>, vector<64x128xf32> -> vector<64x128xf32>
    %c0_3 = arith.constant 0 : index
    %c0_4 = arith.constant 0 : index
    %3 = vector.load %arg6[%c0_3, %c0_4] : memref<1x128xf32, #tpu.memory_space<vmem>>, vector<1x128xf32>
    %4 = vector.broadcast %3 : vector<1x128xf32> to vector<64x128xf32>
    %5 = arith.addf %2, %4 : vector<64x128xf32>
    %c0_5 = arith.constant 0 : index
    %c0_6 = arith.constant 0 : index
    %6 = vector.load %arg5[%c0_5, %c0_6] : memref<32x128xf32, #tpu.memory_space<vmem>>, vector<32x128xf32>
    %c0_7 = arith.constant 0 : index
    %c0_8 = arith.constant 0 : index
    %7 = vector.load %arg7[%c0_7, %c0_8] : memref<1x32xf32, #tpu.memory_space<vmem>>, vector<1x32xf32>
    %c0_9 = arith.constant 0 : index
    %c0_10 = arith.constant 0 : index
    %8 = vector.load %arg8[%c0_9, %c0_10] : memref<1x1xf32, #tpu.memory_space<vmem>>, vector<1x1xf32>
    %9 = tpu.iota {dimensions = array<i32: 1>} : vector<1x8xi32>
    %c0_11 = arith.constant 0 : index
    %c0_12 = arith.constant 0 : index
    %10 = vector.load %arg2[%c0_11, %c0_12] : memref<8x32xf32, #tpu.memory_space<vmem>>, vector<8x32xf32>
    %c0_13 = arith.constant 0 : index
    %c0_14 = arith.constant 0 : index
    %11 = vector.load %arg3[%c0_13, %c0_14] : memref<8x32xf32, #tpu.memory_space<vmem>>, vector<8x32xf32>
    %cst_15 = arith.constant 0.000000e+00 : f32
    %12 = vector.broadcast %cst_15 : f32 to vector<8x8xf32>
    %13 = vector.extract_strided_slice %5 {offsets = [0, 0], sizes = [8, 128], strides = [1, 1]} : vector<64x128xf32> to vector<8x128xf32>
    %cst_16 = arith.constant dense<0.000000e+00> : vector<8x128xf32>
    %14 = tpu.matmul %10, %6, %cst_16 {dimension_numbers = #tpu.dot_dimension_numbers<[1], [0], [0], [1], [0, 0, 1, 1], [], []>} : vector<8x32xf32>, vector<32x128xf32>, vector<8x128xf32> -> vector<8x128xf32>
    %15 = arith.addf %13, %14 : vector<8x128xf32>
    %16 = math.tanh %15 : vector<8x128xf32>
    %17 = vector.extract_strided_slice %16 {offsets = [0, 0], sizes = [8, 32], strides = [1, 1]} : vector<8x128xf32> to vector<8x32xf32>
    %cst_17 = arith.constant 5.000000e-01 : f32
    %18 = vector.broadcast %cst_17 : f32 to vector<8x32xf32>
    %19 = arith.mulf %18, %17 : vector<8x32xf32>
    %cst_18 = arith.constant 5.000000e-01 : f32
    %20 = vector.broadcast %cst_18 : f32 to vector<8x32xf32>
    %21 = arith.addf %19, %20 : vector<8x32xf32>
    %22 = vector.extract_strided_slice %16 {offsets = [0, 32], sizes = [8, 32], strides = [1, 1]} : vector<8x128xf32> to vector<8x32xf32>
    %cst_19 = arith.constant 5.000000e-01 : f32
    %23 = vector.broadcast %cst_19 : f32 to vector<8x32xf32>
    %24 = arith.mulf %23, %22 : vector<8x32xf32>
    %cst_20 = arith.constant 5.000000e-01 : f32
    %25 = vector.broadcast %cst_20 : f32 to vector<8x32xf32>
    %26 = arith.addf %24, %25 : vector<8x32xf32>
    %27 = vector.extract_strided_slice %16 {offsets = [0, 64], sizes = [8, 32], strides = [1, 1]} : vector<8x128xf32> to vector<8x32xf32>
    %28 = vector.extract_strided_slice %16 {offsets = [0, 96], sizes = [8, 32], strides = [1, 1]} : vector<8x128xf32> to vector<8x32xf32>
    %cst_21 = arith.constant 5.000000e-01 : f32
    %29 = vector.broadcast %cst_21 : f32 to vector<8x32xf32>
    %30 = arith.mulf %29, %28 : vector<8x32xf32>
    %cst_22 = arith.constant 5.000000e-01 : f32
    %31 = vector.broadcast %cst_22 : f32 to vector<8x32xf32>
    %32 = arith.addf %30, %31 : vector<8x32xf32>
    %33 = arith.mulf %26, %11 : vector<8x32xf32>
    %34 = arith.mulf %21, %27 : vector<8x32xf32>
    %35 = arith.addf %33, %34 : vector<8x32xf32>
    %36 = math.tanh %35 : vector<8x32xf32>
    %37 = arith.mulf %32, %36 : vector<8x32xf32>
    %38 = vector.broadcast %7 : vector<1x32xf32> to vector<8x32xf32>
    %39 = arith.mulf %37, %38 : vector<8x32xf32>
    %cst_23 = arith.constant dense<0.000000e+00> : vector<8xf32>
    %40 = vector.multi_reduction <add>, %39, %cst_23 [1] : vector<8x32xf32> to vector<8xf32>
    %41 = vector.shape_cast %40 : vector<8xf32> to vector<8x1xf32>
    %42 = vector.broadcast %8 : vector<1x1xf32> to vector<8x1xf32>
    %43 = arith.addf %41, %42 : vector<8x1xf32>
    %c0_i32 = arith.constant 0 : i32
    %44 = vector.broadcast %c0_i32 : i32 to vector<1x8xi32>
    %45 = arith.cmpi eq, %9, %44 : vector<1x8xi32>
    %46 = vector.shape_cast %45 : vector<1x8xi1> to vector<1x8xi1>
    %47 = vector.broadcast %46 : vector<1x8xi1> to vector<8x8xi1>
    %48 = vector.shape_cast %43 : vector<8x1xf32> to vector<8x1xf32>
    %49 = vector.broadcast %48 : vector<8x1xf32> to vector<8x8xf32>
    %50 = arith.select %47, %49, %12 : vector<8x8xi1>, vector<8x8xf32>
    %51 = vector.extract_strided_slice %5 {offsets = [8, 0], sizes = [8, 128], strides = [1, 1]} : vector<64x128xf32> to vector<8x128xf32>
    %cst_24 = arith.constant dense<0.000000e+00> : vector<8x128xf32>
    %52 = tpu.matmul %37, %6, %cst_24 {dimension_numbers = #tpu.dot_dimension_numbers<[1], [0], [0], [1], [0, 0, 1, 1], [], []>} : vector<8x32xf32>, vector<32x128xf32>, vector<8x128xf32> -> vector<8x128xf32>
    %53 = arith.addf %51, %52 : vector<8x128xf32>
    %54 = math.tanh %53 : vector<8x128xf32>
    %55 = vector.extract_strided_slice %54 {offsets = [0, 0], sizes = [8, 32], strides = [1, 1]} : vector<8x128xf32> to vector<8x32xf32>
    %cst_25 = arith.constant 5.000000e-01 : f32
    %56 = vector.broadcast %cst_25 : f32 to vector<8x32xf32>
    %57 = arith.mulf %56, %55 : vector<8x32xf32>
    %cst_26 = arith.constant 5.000000e-01 : f32
    %58 = vector.broadcast %cst_26 : f32 to vector<8x32xf32>
    %59 = arith.addf %57, %58 : vector<8x32xf32>
    %60 = vector.extract_strided_slice %54 {offsets = [0, 32], sizes = [8, 32], strides = [1, 1]} : vector<8x128xf32> to vector<8x32xf32>
    %cst_27 = arith.constant 5.000000e-01 : f32
    %61 = vector.broadcast %cst_27 : f32 to vector<8x32xf32>
    %62 = arith.mulf %61, %60 : vector<8x32xf32>
    %cst_28 = arith.constant 5.000000e-01 : f32
    %63 = vector.broadcast %cst_28 : f32 to vector<8x32xf32>
    %64 = arith.addf %62, %63 : vector<8x32xf32>
    %65 = vector.extract_strided_slice %54 {offsets = [0, 64], sizes = [8, 32], strides = [1, 1]} : vector<8x128xf32> to vector<8x32xf32>
    %66 = vector.extract_strided_slice %54 {offsets = [0, 96], sizes = [8, 32], strides = [1, 1]} : vector<8x128xf32> to vector<8x32xf32>
    %cst_29 = arith.constant 5.000000e-01 : f32
    %67 = vector.broadcast %cst_29 : f32 to vector<8x32xf32>
    %68 = arith.mulf %67, %66 : vector<8x32xf32>
    %cst_30 = arith.constant 5.000000e-01 : f32
    %69 = vector.broadcast %cst_30 : f32 to vector<8x32xf32>
    %70 = arith.addf %68, %69 : vector<8x32xf32>
    %71 = arith.mulf %64, %35 : vector<8x32xf32>
    %72 = arith.mulf %59, %65 : vector<8x32xf32>
    %73 = arith.addf %71, %72 : vector<8x32xf32>
    %74 = math.tanh %73 : vector<8x32xf32>
    %75 = arith.mulf %70, %74 : vector<8x32xf32>
    %76 = vector.broadcast %7 : vector<1x32xf32> to vector<8x32xf32>
    %77 = arith.mulf %75, %76 : vector<8x32xf32>
    %cst_31 = arith.constant dense<0.000000e+00> : vector<8xf32>
    %78 = vector.multi_reduction <add>, %77, %cst_31 [1] : vector<8x32xf32> to vector<8xf32>
    %79 = vector.shape_cast %78 : vector<8xf32> to vector<8x1xf32>
    %80 = vector.broadcast %8 : vector<1x1xf32> to vector<8x1xf32>
    %81 = arith.addf %79, %80 : vector<8x1xf32>
    %c1_i32 = arith.constant 1 : i32
    %82 = vector.broadcast %c1_i32 : i32 to vector<1x8xi32>
    %83 = arith.cmpi eq, %9, %82 : vector<1x8xi32>
    %84 = vector.shape_cast %83 : vector<1x8xi1> to vector<1x8xi1>
    %85 = vector.broadcast %84 : vector<1x8xi1> to vector<8x8xi1>
    %86 = vector.shape_cast %81 : vector<8x1xf32> to vector<8x1xf32>
    %87 = vector.broadcast %86 : vector<8x1xf32> to vector<8x8xf32>
    %88 = arith.select %85, %87, %50 : vector<8x8xi1>, vector<8x8xf32>
    %89 = vector.extract_strided_slice %5 {offsets = [16, 0], sizes = [8, 128], strides = [1, 1]} : vector<64x128xf32> to vector<8x128xf32>
    %cst_32 = arith.constant dense<0.000000e+00> : vector<8x128xf32>
    %90 = tpu.matmul %75, %6, %cst_32 {dimension_numbers = #tpu.dot_dimension_numbers<[1], [0], [0], [1], [0, 0, 1, 1], [], []>} : vector<8x32xf32>, vector<32x128xf32>, vector<8x128xf32> -> vector<8x128xf32>
    %91 = arith.addf %89, %90 : vector<8x128xf32>
    %92 = math.tanh %91 : vector<8x128xf32>
    %93 = vector.extract_strided_slice %92 {offsets = [0, 0], sizes = [8, 32], strides = [1, 1]} : vector<8x128xf32> to vector<8x32xf32>
    %cst_33 = arith.constant 5.000000e-01 : f32
    %94 = vector.broadcast %cst_33 : f32 to vector<8x32xf32>
    %95 = arith.mulf %94, %93 : vector<8x32xf32>
    %cst_34 = arith.constant 5.000000e-01 : f32
    %96 = vector.broadcast %cst_34 : f32 to vector<8x32xf32>
    %97 = arith.addf %95, %96 : vector<8x32xf32>
    %98 = vector.extract_strided_slice %92 {offsets = [0, 32], sizes = [8, 32], strides = [1, 1]} : vector<8x128xf32> to vector<8x32xf32>
    %cst_35 = arith.constant 5.000000e-01 : f32
    %99 = vector.broadcast %cst_35 : f32 to vector<8x32xf32>
    %100 = arith.mulf %99, %98 : vector<8x32xf32>
    %cst_36 = arith.constant 5.000000e-01 : f32
    %101 = vector.broadcast %cst_36 : f32 to vector<8x32xf32>
    %102 = arith.addf %100, %101 : vector<8x32xf32>
    %103 = vector.extract_strided_slice %92 {offsets = [0, 64], sizes = [8, 32], strides = [1, 1]} : vector<8x128xf32> to vector<8x32xf32>
    %104 = vector.extract_strided_slice %92 {offsets = [0, 96], sizes = [8, 32], strides = [1, 1]} : vector<8x128xf32> to vector<8x32xf32>
    %cst_37 = arith.constant 5.000000e-01 : f32
    %105 = vector.broadcast %cst_37 : f32 to vector<8x32xf32>
    %106 = arith.mulf %105, %104 : vector<8x32xf32>
    %cst_38 = arith.constant 5.000000e-01 : f32
    %107 = vector.broadcast %cst_38 : f32 to vector<8x32xf32>
    %108 = arith.addf %106, %107 : vector<8x32xf32>
    %109 = arith.mulf %102, %73 : vector<8x32xf32>
    %110 = arith.mulf %97, %103 : vector<8x32xf32>
    %111 = arith.addf %109, %110 : vector<8x32xf32>
    %112 = math.tanh %111 : vector<8x32xf32>
    %113 = arith.mulf %108, %112 : vector<8x32xf32>
    %114 = vector.broadcast %7 : vector<1x32xf32> to vector<8x32xf32>
    %115 = arith.mulf %113, %114 : vector<8x32xf32>
    %cst_39 = arith.constant dense<0.000000e+00> : vector<8xf32>
    %116 = vector.multi_reduction <add>, %115, %cst_39 [1] : vector<8x32xf32> to vector<8xf32>
    %117 = vector.shape_cast %116 : vector<8xf32> to vector<8x1xf32>
    %118 = vector.broadcast %8 : vector<1x1xf32> to vector<8x1xf32>
    %119 = arith.addf %117, %118 : vector<8x1xf32>
    %c2_i32 = arith.constant 2 : i32
    %120 = vector.broadcast %c2_i32 : i32 to vector<1x8xi32>
    %121 = arith.cmpi eq, %9, %120 : vector<1x8xi32>
    %122 = vector.shape_cast %121 : vector<1x8xi1> to vector<1x8xi1>
    %123 = vector.broadcast %122 : vector<1x8xi1> to vector<8x8xi1>
    %124 = vector.shape_cast %119 : vector<8x1xf32> to vector<8x1xf32>
    %125 = vector.broadcast %124 : vector<8x1xf32> to vector<8x8xf32>
    %126 = arith.select %123, %125, %88 : vector<8x8xi1>, vector<8x8xf32>
    %127 = vector.extract_strided_slice %5 {offsets = [24, 0], sizes = [8, 128], strides = [1, 1]} : vector<64x128xf32> to vector<8x128xf32>
    %cst_40 = arith.constant dense<0.000000e+00> : vector<8x128xf32>
    %128 = tpu.matmul %113, %6, %cst_40 {dimension_numbers = #tpu.dot_dimension_numbers<[1], [0], [0], [1], [0, 0, 1, 1], [], []>} : vector<8x32xf32>, vector<32x128xf32>, vector<8x128xf32> -> vector<8x128xf32>
    %129 = arith.addf %127, %128 : vector<8x128xf32>
    %130 = math.tanh %129 : vector<8x128xf32>
    %131 = vector.extract_strided_slice %130 {offsets = [0, 0], sizes = [8, 32], strides = [1, 1]} : vector<8x128xf32> to vector<8x32xf32>
    %cst_41 = arith.constant 5.000000e-01 : f32
    %132 = vector.broadcast %cst_41 : f32 to vector<8x32xf32>
    %133 = arith.mulf %132, %131 : vector<8x32xf32>
    %cst_42 = arith.constant 5.000000e-01 : f32
    %134 = vector.broadcast %cst_42 : f32 to vector<8x32xf32>
    %135 = arith.addf %133, %134 : vector<8x32xf32>
    %136 = vector.extract_strided_slice %130 {offsets = [0, 32], sizes = [8, 32], strides = [1, 1]} : vector<8x128xf32> to vector<8x32xf32>
    %cst_43 = arith.constant 5.000000e-01 : f32
    %137 = vector.broadcast %cst_43 : f32 to vector<8x32xf32>
    %138 = arith.mulf %137, %136 : vector<8x32xf32>
    %cst_44 = arith.constant 5.000000e-01 : f32
    %139 = vector.broadcast %cst_44 : f32 to vector<8x32xf32>
    %140 = arith.addf %138, %139 : vector<8x32xf32>
    %141 = vector.extract_strided_slice %130 {offsets = [0, 64], sizes = [8, 32], strides = [1, 1]} : vector<8x128xf32> to vector<8x32xf32>
    %142 = vector.extract_strided_slice %130 {offsets = [0, 96], sizes = [8, 32], strides = [1, 1]} : vector<8x128xf32> to vector<8x32xf32>
    %cst_45 = arith.constant 5.000000e-01 : f32
    %143 = vector.broadcast %cst_45 : f32 to vector<8x32xf32>
    %144 = arith.mulf %143, %142 : vector<8x32xf32>
    %cst_46 = arith.constant 5.000000e-01 : f32
    %145 = vector.broadcast %cst_46 : f32 to vector<8x32xf32>
    %146 = arith.addf %144, %145 : vector<8x32xf32>
    %147 = arith.mulf %140, %111 : vector<8x32xf32>
    %148 = arith.mulf %135, %141 : vector<8x32xf32>
    %149 = arith.addf %147, %148 : vector<8x32xf32>
    %150 = math.tanh %149 : vector<8x32xf32>
    %151 = arith.mulf %146, %150 : vector<8x32xf32>
    %152 = vector.broadcast %7 : vector<1x32xf32> to vector<8x32xf32>
    %153 = arith.mulf %151, %152 : vector<8x32xf32>
    %cst_47 = arith.constant dense<0.000000e+00> : vector<8xf32>
    %154 = vector.multi_reduction <add>, %153, %cst_47 [1] : vector<8x32xf32> to vector<8xf32>
    %155 = vector.shape_cast %154 : vector<8xf32> to vector<8x1xf32>
    %156 = vector.broadcast %8 : vector<1x1xf32> to vector<8x1xf32>
    %157 = arith.addf %155, %156 : vector<8x1xf32>
    %c3_i32 = arith.constant 3 : i32
    %158 = vector.broadcast %c3_i32 : i32 to vector<1x8xi32>
    %159 = arith.cmpi eq, %9, %158 : vector<1x8xi32>
    %160 = vector.shape_cast %159 : vector<1x8xi1> to vector<1x8xi1>
    %161 = vector.broadcast %160 : vector<1x8xi1> to vector<8x8xi1>
    %162 = vector.shape_cast %157 : vector<8x1xf32> to vector<8x1xf32>
    %163 = vector.broadcast %162 : vector<8x1xf32> to vector<8x8xf32>
    %164 = arith.select %161, %163, %126 : vector<8x8xi1>, vector<8x8xf32>
    %165 = vector.extract_strided_slice %5 {offsets = [32, 0], sizes = [8, 128], strides = [1, 1]} : vector<64x128xf32> to vector<8x128xf32>
    %cst_48 = arith.constant dense<0.000000e+00> : vector<8x128xf32>
    %166 = tpu.matmul %151, %6, %cst_48 {dimension_numbers = #tpu.dot_dimension_numbers<[1], [0], [0], [1], [0, 0, 1, 1], [], []>} : vector<8x32xf32>, vector<32x128xf32>, vector<8x128xf32> -> vector<8x128xf32>
    %167 = arith.addf %165, %166 : vector<8x128xf32>
    %168 = math.tanh %167 : vector<8x128xf32>
    %169 = vector.extract_strided_slice %168 {offsets = [0, 0], sizes = [8, 32], strides = [1, 1]} : vector<8x128xf32> to vector<8x32xf32>
    %cst_49 = arith.constant 5.000000e-01 : f32
    %170 = vector.broadcast %cst_49 : f32 to vector<8x32xf32>
    %171 = arith.mulf %170, %169 : vector<8x32xf32>
    %cst_50 = arith.constant 5.000000e-01 : f32
    %172 = vector.broadcast %cst_50 : f32 to vector<8x32xf32>
    %173 = arith.addf %171, %172 : vector<8x32xf32>
    %174 = vector.extract_strided_slice %168 {offsets = [0, 32], sizes = [8, 32], strides = [1, 1]} : vector<8x128xf32> to vector<8x32xf32>
    %cst_51 = arith.constant 5.000000e-01 : f32
    %175 = vector.broadcast %cst_51 : f32 to vector<8x32xf32>
    %176 = arith.mulf %175, %174 : vector<8x32xf32>
    %cst_52 = arith.constant 5.000000e-01 : f32
    %177 = vector.broadcast %cst_52 : f32 to vector<8x32xf32>
    %178 = arith.addf %176, %177 : vector<8x32xf32>
    %179 = vector.extract_strided_slice %168 {offsets = [0, 64], sizes = [8, 32], strides = [1, 1]} : vector<8x128xf32> to vector<8x32xf32>
    %180 = vector.extract_strided_slice %168 {offsets = [0, 96], sizes = [8, 32], strides = [1, 1]} : vector<8x128xf32> to vector<8x32xf32>
    %cst_53 = arith.constant 5.000000e-01 : f32
    %181 = vector.broadcast %cst_53 : f32 to vector<8x32xf32>
    %182 = arith.mulf %181, %180 : vector<8x32xf32>
    %cst_54 = arith.constant 5.000000e-01 : f32
    %183 = vector.broadcast %cst_54 : f32 to vector<8x32xf32>
    %184 = arith.addf %182, %183 : vector<8x32xf32>
    %185 = arith.mulf %178, %149 : vector<8x32xf32>
    %186 = arith.mulf %173, %179 : vector<8x32xf32>
    %187 = arith.addf %185, %186 : vector<8x32xf32>
    %188 = math.tanh %187 : vector<8x32xf32>
    %189 = arith.mulf %184, %188 : vector<8x32xf32>
    %190 = vector.broadcast %7 : vector<1x32xf32> to vector<8x32xf32>
    %191 = arith.mulf %189, %190 : vector<8x32xf32>
    %cst_55 = arith.constant dense<0.000000e+00> : vector<8xf32>
    %192 = vector.multi_reduction <add>, %191, %cst_55 [1] : vector<8x32xf32> to vector<8xf32>
    %193 = vector.shape_cast %192 : vector<8xf32> to vector<8x1xf32>
    %194 = vector.broadcast %8 : vector<1x1xf32> to vector<8x1xf32>
    %195 = arith.addf %193, %194 : vector<8x1xf32>
    %c4_i32 = arith.constant 4 : i32
    %196 = vector.broadcast %c4_i32 : i32 to vector<1x8xi32>
    %197 = arith.cmpi eq, %9, %196 : vector<1x8xi32>
    %198 = vector.shape_cast %197 : vector<1x8xi1> to vector<1x8xi1>
    %199 = vector.broadcast %198 : vector<1x8xi1> to vector<8x8xi1>
    %200 = vector.shape_cast %195 : vector<8x1xf32> to vector<8x1xf32>
    %201 = vector.broadcast %200 : vector<8x1xf32> to vector<8x8xf32>
    %202 = arith.select %199, %201, %164 : vector<8x8xi1>, vector<8x8xf32>
    %203 = vector.extract_strided_slice %5 {offsets = [40, 0], sizes = [8, 128], strides = [1, 1]} : vector<64x128xf32> to vector<8x128xf32>
    %cst_56 = arith.constant dense<0.000000e+00> : vector<8x128xf32>
    %204 = tpu.matmul %189, %6, %cst_56 {dimension_numbers = #tpu.dot_dimension_numbers<[1], [0], [0], [1], [0, 0, 1, 1], [], []>} : vector<8x32xf32>, vector<32x128xf32>, vector<8x128xf32> -> vector<8x128xf32>
    %205 = arith.addf %203, %204 : vector<8x128xf32>
    %206 = math.tanh %205 : vector<8x128xf32>
    %207 = vector.extract_strided_slice %206 {offsets = [0, 0], sizes = [8, 32], strides = [1, 1]} : vector<8x128xf32> to vector<8x32xf32>
    %cst_57 = arith.constant 5.000000e-01 : f32
    %208 = vector.broadcast %cst_57 : f32 to vector<8x32xf32>
    %209 = arith.mulf %208, %207 : vector<8x32xf32>
    %cst_58 = arith.constant 5.000000e-01 : f32
    %210 = vector.broadcast %cst_58 : f32 to vector<8x32xf32>
    %211 = arith.addf %209, %210 : vector<8x32xf32>
    %212 = vector.extract_strided_slice %206 {offsets = [0, 32], sizes = [8, 32], strides = [1, 1]} : vector<8x128xf32> to vector<8x32xf32>
    %cst_59 = arith.constant 5.000000e-01 : f32
    %213 = vector.broadcast %cst_59 : f32 to vector<8x32xf32>
    %214 = arith.mulf %213, %212 : vector<8x32xf32>
    %cst_60 = arith.constant 5.000000e-01 : f32
    %215 = vector.broadcast %cst_60 : f32 to vector<8x32xf32>
    %216 = arith.addf %214, %215 : vector<8x32xf32>
    %217 = vector.extract_strided_slice %206 {offsets = [0, 64], sizes = [8, 32], strides = [1, 1]} : vector<8x128xf32> to vector<8x32xf32>
    %218 = vector.extract_strided_slice %206 {offsets = [0, 96], sizes = [8, 32], strides = [1, 1]} : vector<8x128xf32> to vector<8x32xf32>
    %cst_61 = arith.constant 5.000000e-01 : f32
    %219 = vector.broadcast %cst_61 : f32 to vector<8x32xf32>
    %220 = arith.mulf %219, %218 : vector<8x32xf32>
    %cst_62 = arith.constant 5.000000e-01 : f32
    %221 = vector.broadcast %cst_62 : f32 to vector<8x32xf32>
    %222 = arith.addf %220, %221 : vector<8x32xf32>
    %223 = arith.mulf %216, %187 : vector<8x32xf32>
    %224 = arith.mulf %211, %217 : vector<8x32xf32>
    %225 = arith.addf %223, %224 : vector<8x32xf32>
    %226 = math.tanh %225 : vector<8x32xf32>
    %227 = arith.mulf %222, %226 : vector<8x32xf32>
    %228 = vector.broadcast %7 : vector<1x32xf32> to vector<8x32xf32>
    %229 = arith.mulf %227, %228 : vector<8x32xf32>
    %cst_63 = arith.constant dense<0.000000e+00> : vector<8xf32>
    %230 = vector.multi_reduction <add>, %229, %cst_63 [1] : vector<8x32xf32> to vector<8xf32>
    %231 = vector.shape_cast %230 : vector<8xf32> to vector<8x1xf32>
    %232 = vector.broadcast %8 : vector<1x1xf32> to vector<8x1xf32>
    %233 = arith.addf %231, %232 : vector<8x1xf32>
    %c5_i32 = arith.constant 5 : i32
    %234 = vector.broadcast %c5_i32 : i32 to vector<1x8xi32>
    %235 = arith.cmpi eq, %9, %234 : vector<1x8xi32>
    %236 = vector.shape_cast %235 : vector<1x8xi1> to vector<1x8xi1>
    %237 = vector.broadcast %236 : vector<1x8xi1> to vector<8x8xi1>
    %238 = vector.shape_cast %233 : vector<8x1xf32> to vector<8x1xf32>
    %239 = vector.broadcast %238 : vector<8x1xf32> to vector<8x8xf32>
    %240 = arith.select %237, %239, %202 : vector<8x8xi1>, vector<8x8xf32>
    %241 = vector.extract_strided_slice %5 {offsets = [48, 0], sizes = [8, 128], strides = [1, 1]} : vector<64x128xf32> to vector<8x128xf32>
    %cst_64 = arith.constant dense<0.000000e+00> : vector<8x128xf32>
    %242 = tpu.matmul %227, %6, %cst_64 {dimension_numbers = #tpu.dot_dimension_numbers<[1], [0], [0], [1], [0, 0, 1, 1], [], []>} : vector<8x32xf32>, vector<32x128xf32>, vector<8x128xf32> -> vector<8x128xf32>
    %243 = arith.addf %241, %242 : vector<8x128xf32>
    %244 = math.tanh %243 : vector<8x128xf32>
    %245 = vector.extract_strided_slice %244 {offsets = [0, 0], sizes = [8, 32], strides = [1, 1]} : vector<8x128xf32> to vector<8x32xf32>
    %cst_65 = arith.constant 5.000000e-01 : f32
    %246 = vector.broadcast %cst_65 : f32 to vector<8x32xf32>
    %247 = arith.mulf %246, %245 : vector<8x32xf32>
    %cst_66 = arith.constant 5.000000e-01 : f32
    %248 = vector.broadcast %cst_66 : f32 to vector<8x32xf32>
    %249 = arith.addf %247, %248 : vector<8x32xf32>
    %250 = vector.extract_strided_slice %244 {offsets = [0, 32], sizes = [8, 32], strides = [1, 1]} : vector<8x128xf32> to vector<8x32xf32>
    %cst_67 = arith.constant 5.000000e-01 : f32
    %251 = vector.broadcast %cst_67 : f32 to vector<8x32xf32>
    %252 = arith.mulf %251, %250 : vector<8x32xf32>
    %cst_68 = arith.constant 5.000000e-01 : f32
    %253 = vector.broadcast %cst_68 : f32 to vector<8x32xf32>
    %254 = arith.addf %252, %253 : vector<8x32xf32>
    %255 = vector.extract_strided_slice %244 {offsets = [0, 64], sizes = [8, 32], strides = [1, 1]} : vector<8x128xf32> to vector<8x32xf32>
    %256 = vector.extract_strided_slice %244 {offsets = [0, 96], sizes = [8, 32], strides = [1, 1]} : vector<8x128xf32> to vector<8x32xf32>
    %cst_69 = arith.constant 5.000000e-01 : f32
    %257 = vector.broadcast %cst_69 : f32 to vector<8x32xf32>
    %258 = arith.mulf %257, %256 : vector<8x32xf32>
    %cst_70 = arith.constant 5.000000e-01 : f32
    %259 = vector.broadcast %cst_70 : f32 to vector<8x32xf32>
    %260 = arith.addf %258, %259 : vector<8x32xf32>
    %261 = arith.mulf %254, %225 : vector<8x32xf32>
    %262 = arith.mulf %249, %255 : vector<8x32xf32>
    %263 = arith.addf %261, %262 : vector<8x32xf32>
    %264 = math.tanh %263 : vector<8x32xf32>
    %265 = arith.mulf %260, %264 : vector<8x32xf32>
    %266 = vector.broadcast %7 : vector<1x32xf32> to vector<8x32xf32>
    %267 = arith.mulf %265, %266 : vector<8x32xf32>
    %cst_71 = arith.constant dense<0.000000e+00> : vector<8xf32>
    %268 = vector.multi_reduction <add>, %267, %cst_71 [1] : vector<8x32xf32> to vector<8xf32>
    %269 = vector.shape_cast %268 : vector<8xf32> to vector<8x1xf32>
    %270 = vector.broadcast %8 : vector<1x1xf32> to vector<8x1xf32>
    %271 = arith.addf %269, %270 : vector<8x1xf32>
    %c6_i32 = arith.constant 6 : i32
    %272 = vector.broadcast %c6_i32 : i32 to vector<1x8xi32>
    %273 = arith.cmpi eq, %9, %272 : vector<1x8xi32>
    %274 = vector.shape_cast %273 : vector<1x8xi1> to vector<1x8xi1>
    %275 = vector.broadcast %274 : vector<1x8xi1> to vector<8x8xi1>
    %276 = vector.shape_cast %271 : vector<8x1xf32> to vector<8x1xf32>
    %277 = vector.broadcast %276 : vector<8x1xf32> to vector<8x8xf32>
    %278 = arith.select %275, %277, %240 : vector<8x8xi1>, vector<8x8xf32>
    %279 = vector.extract_strided_slice %5 {offsets = [56, 0], sizes = [8, 128], strides = [1, 1]} : vector<64x128xf32> to vector<8x128xf32>
    %cst_72 = arith.constant dense<0.000000e+00> : vector<8x128xf32>
    %280 = tpu.matmul %265, %6, %cst_72 {dimension_numbers = #tpu.dot_dimension_numbers<[1], [0], [0], [1], [0, 0, 1, 1], [], []>} : vector<8x32xf32>, vector<32x128xf32>, vector<8x128xf32> -> vector<8x128xf32>
    %281 = arith.addf %279, %280 : vector<8x128xf32>
    %282 = math.tanh %281 : vector<8x128xf32>
    %283 = vector.extract_strided_slice %282 {offsets = [0, 0], sizes = [8, 32], strides = [1, 1]} : vector<8x128xf32> to vector<8x32xf32>
    %cst_73 = arith.constant 5.000000e-01 : f32
    %284 = vector.broadcast %cst_73 : f32 to vector<8x32xf32>
    %285 = arith.mulf %284, %283 : vector<8x32xf32>
    %cst_74 = arith.constant 5.000000e-01 : f32
    %286 = vector.broadcast %cst_74 : f32 to vector<8x32xf32>
    %287 = arith.addf %285, %286 : vector<8x32xf32>
    %288 = vector.extract_strided_slice %282 {offsets = [0, 32], sizes = [8, 32], strides = [1, 1]} : vector<8x128xf32> to vector<8x32xf32>
    %cst_75 = arith.constant 5.000000e-01 : f32
    %289 = vector.broadcast %cst_75 : f32 to vector<8x32xf32>
    %290 = arith.mulf %289, %288 : vector<8x32xf32>
    %cst_76 = arith.constant 5.000000e-01 : f32
    %291 = vector.broadcast %cst_76 : f32 to vector<8x32xf32>
    %292 = arith.addf %290, %291 : vector<8x32xf32>
    %293 = vector.extract_strided_slice %282 {offsets = [0, 64], sizes = [8, 32], strides = [1, 1]} : vector<8x128xf32> to vector<8x32xf32>
    %294 = vector.extract_strided_slice %282 {offsets = [0, 96], sizes = [8, 32], strides = [1, 1]} : vector<8x128xf32> to vector<8x32xf32>
    %cst_77 = arith.constant 5.000000e-01 : f32
    %295 = vector.broadcast %cst_77 : f32 to vector<8x32xf32>
    %296 = arith.mulf %295, %294 : vector<8x32xf32>
    %cst_78 = arith.constant 5.000000e-01 : f32
    %297 = vector.broadcast %cst_78 : f32 to vector<8x32xf32>
    %298 = arith.addf %296, %297 : vector<8x32xf32>
    %299 = arith.mulf %292, %263 : vector<8x32xf32>
    %300 = arith.mulf %287, %293 : vector<8x32xf32>
    %301 = arith.addf %299, %300 : vector<8x32xf32>
    %302 = math.tanh %301 : vector<8x32xf32>
    %303 = arith.mulf %298, %302 : vector<8x32xf32>
    %304 = vector.broadcast %7 : vector<1x32xf32> to vector<8x32xf32>
    %305 = arith.mulf %303, %304 : vector<8x32xf32>
    %cst_79 = arith.constant dense<0.000000e+00> : vector<8xf32>
    %306 = vector.multi_reduction <add>, %305, %cst_79 [1] : vector<8x32xf32> to vector<8xf32>
    %307 = vector.shape_cast %306 : vector<8xf32> to vector<8x1xf32>
    %308 = vector.broadcast %8 : vector<1x1xf32> to vector<8x1xf32>
    %309 = arith.addf %307, %308 : vector<8x1xf32>
    %c7_i32 = arith.constant 7 : i32
    %310 = vector.broadcast %c7_i32 : i32 to vector<1x8xi32>
    %311 = arith.cmpi eq, %9, %310 : vector<1x8xi32>
    %312 = vector.shape_cast %311 : vector<1x8xi1> to vector<1x8xi1>
    %313 = vector.broadcast %312 : vector<1x8xi1> to vector<8x8xi1>
    %314 = vector.shape_cast %309 : vector<8x1xf32> to vector<8x1xf32>
    %315 = vector.broadcast %314 : vector<8x1xf32> to vector<8x8xf32>
    %316 = arith.select %313, %315, %278 : vector<8x8xi1>, vector<8x8xf32>
    %c0_80 = arith.constant 0 : index
    %c0_81 = arith.constant 0 : index
    %317 = vector.load %arg9[%c0_80, %c0_81] : memref<8x8xf32, #tpu.memory_space<vmem>>, vector<8x8xf32>
    tpu.vector_store %arg9[%c0_80, %c0_81], %316 {strides = array<i32>} : memref<8x8xf32, #tpu.memory_space<vmem>>, vector<8x8xf32>,
    %c0_82 = arith.constant 0 : index
    %c0_83 = arith.constant 0 : index
    %318 = vector.load %arg10[%c0_82, %c0_83] : memref<8x32xf32, #tpu.memory_space<vmem>>, vector<8x32xf32>
    tpu.vector_store %arg10[%c0_82, %c0_83], %303 {strides = array<i32>} : memref<8x32xf32, #tpu.memory_space<vmem>>, vector<8x32xf32>,
    %c0_84 = arith.constant 0 : index
    %c0_85 = arith.constant 0 : index
    %319 = vector.load %arg11[%c0_84, %c0_85] : memref<8x32xf32, #tpu.memory_space<vmem>>, vector<8x32xf32>
    tpu.vector_store %arg11[%c0_84, %c0_85], %301 {strides = array<i32>} : memref<8x32xf32, #tpu.memory_space<vmem>>, vector<8x32xf32>,
    return
  }
  func.func @transform_0(%arg0: i32) -> (i32, i32) {
    %c0_i32 = arith.constant 0 : i32
    %c0_i32_0 = arith.constant 0 : i32
    %c0_i32_1 = arith.constant 0 : i32
    return %c0_i32, %c0_i32_0 : i32, i32
  }
  func.func @transform_1(%arg0: i32) -> (i32, i32) {
    %c0_i32 = arith.constant 0 : i32
    %c0_i32_0 = arith.constant 0 : i32
    %c0_i32_1 = arith.constant 0 : i32
    return %c0_i32, %c0_i32_0 : i32, i32
  }
  func.func @transform_2(%arg0: i32) -> (i32, i32) {
    %c0_i32 = arith.constant 0 : i32
    %c0_i32_0 = arith.constant 0 : i32
    %c0_i32_1 = arith.constant 0 : i32
    return %c0_i32, %c0_i32_0 : i32, i32
  }
  func.func @transform_3(%arg0: i32) -> (i32, i32) {
    %c0_i32 = arith.constant 0 : i32
    %c0_i32_0 = arith.constant 0 : i32
    %c0_i32_1 = arith.constant 0 : i32
    return %c0_i32, %c0_i32_0 : i32, i32
  }
  func.func @transform_4(%arg0: i32) -> (i32, i32) {
    %c0_i32 = arith.constant 0 : i32
    %c0_i32_0 = arith.constant 0 : i32
    %c0_i32_1 = arith.constant 0 : i32
    return %c0_i32, %c0_i32_0 : i32, i32
  }
  func.func @transform_5(%arg0: i32) -> (i32, i32) {
    %c0_i32 = arith.constant 0 : i32
    %c0_i32_0 = arith.constant 0 : i32
    %c0_i32_1 = arith.constant 0 : i32
    return %c0_i32, %c0_i32_0 : i32, i32
  }
  func.func @transform_6(%arg0: i32) -> (i32, i32) {
    %c0_i32 = arith.constant 0 : i32
    %c0_i32_0 = arith.constant 0 : i32
    %c0_i32_1 = arith.constant 0 : i32
    return %c0_i32, %c0_i32_0 : i32, i32
  }
  func.func @transform_7(%arg0: i32) -> (i32, i32) {
    %c0_i32 = arith.constant 0 : i32
    %c0_i32_0 = arith.constant 0 : i32
    %c0_i32_1 = arith.constant 0 : i32
    return %c0_i32, %c0_i32_0 : i32, i32
  }
  func.func @transform_8(%arg0: i32) -> (i32, i32) {
    %c0_i32 = arith.constant 0 : i32
    %c0_i32_0 = arith.constant 0 : i32
    %c0_i32_1 = arith.constant 0 : i32
    return %c0_i32, %c0_i32_0 : i32, i32
  }
  func.func @transform_9(%arg0: i32) -> (i32, i32) {
    %c0_i32 = arith.constant 0 : i32
    %c0_i32_0 = arith.constant 0 : i32
    %c0_i32_1 = arith.constant 0 : i32
    return %c0_i32, %c0_i32_0 : i32, i32
  }
  func.func @transform_10(%arg0: i32) -> (i32, i32) {
    %c0_i32 = arith.constant 0 : i32
    %c0_i32_0 = arith.constant 0 : i32
    %c0_i32_1 = arith.constant 0 : i32
    return %c0_i32, %c0_i32_0 : i32, i32
  }
}

</mosaic_0001>

<llo_original>
// kernel: critic_forward.1
$region0: #{critic_forward.1}
  #allocation0 [shape = 'u32[]', space=smem, size = 0x4, offset = 0x4, fixed_abs, tag = 'smem constant byte address 0x4 - core index']
  #allocation1 [shape = 'u32[72,128]{1,0:T(1,128)}', space=vmem, size = 0x9000, scoped, tag = 'internal scratch']
  #allocation2 [shape = 'f32[1,1]{1,0:T(1,128)S(1)}', space=vmem, size = 0x200, scoped, tag = 'scoped memory for critic_forward.1']
  %s0 = inlined_call_operand.vmem [shape: f32[64,16], index: 0, kind: input, shape index: {}]
  %s1 = inlined_call_operand.vmem [shape: f32[8,32], index: 1, kind: input, shape index: {}, may-alias: {1,2}]
  %s2 = inlined_call_operand.vmem [shape: f32[8,32], index: 2, kind: input, shape index: {}, may-alias: {1,2}]
  %s3 = inlined_call_operand.vmem [shape: f32[16,128], index: 3, kind: input, shape index: {}]
  %s4 = inlined_call_operand.vmem [shape: f32[32,128], index: 4, kind: input, shape index: {}]
  %s5 = inlined_call_operand.vmem [shape: f32[1,128], index: 5, kind: input, shape index: {}]
  %s6 = inlined_call_operand.vmem [shape: f32[1,32], index: 6, kind: input, shape index: {}]
  %s7 = inlined_call_operand.<no memory space> [shape: f32[1,1], index: 7, kind: input, shape index: {}]
  %s8 = inlined_call_operand.vmem [shape: f32[8,8], index: 8, kind: output, shape index: {0}]
  %s9 = inlined_call_operand.vmem [shape: f32[8,32], index: 9, kind: output, shape index: {1}]
  %s10 = inlined_call_operand.vmem [shape: f32[8,32], index: 10, kind: output, shape index: {2}]
  %11 = xla_tuple %s8, %s9, %s10
  %s12 = sld [smem:[#allocation0]]
  $region58: #{critic_forward.1} parent=0
    _
  %s14 = ssub.s32 1, %s12
  %s15 = scalar_select 0, %s14, %s12
  %v16 = vstv %s7
  %17 = vst [vmem:[#allocation2] sm:$0x1] %v16
  // Predicated region
  $region2: #{critic_forward.1} parent=0 // pred_check
    _
  $region3: #{critic_forward.1} parent=0 // pred_check_branch
    %19 = sbr.rel (0) target = $region5
  $region4: #{critic_forward.1} parent=0 // pred_region
    _
  $region5: #{critic_forward.1} parent=0 // pred_fallthru
    _
  // Predicated region
  $region6: #{critic_forward.1} parent=0 // pred_check
    _
  $region7: #{critic_forward.1} parent=0 // pred_check_branch
    %21 = sbr.rel (0) target = $region9
  $region8: #{critic_forward.1} parent=0 // pred_region
    _
  $region9: #{critic_forward.1} parent=0 // pred_fallthru
    _
  // Predicated region
  $region10: #{critic_forward.1} parent=0 // pred_check
    _
  $region11: #{critic_forward.1} parent=0 // pred_check_branch
    %23 = sbr.rel (0) target = $region13
  $region12: #{critic_forward.1} parent=0 // pred_region
    _
  $region13: #{critic_forward.1} parent=0 // pred_fallthru
    _
  // Predicated region
  $region14: #{critic_forward.1} parent=0 // pred_check
    _
  $region15: #{critic_forward.1} parent=0 // pred_check_branch
    %25 = sbr.rel (0) target = $region17
  $region16: #{critic_forward.1} parent=0 // pred_region
    _
  $region17: #{critic_forward.1} parent=0 // pred_fallthru
    _
  // Predicated region
  $region18: #{critic_forward.1} parent=0 // pred_check
    _
  $region19: #{critic_forward.1} parent=0 // pred_check_branch
    %27 = sbr.rel (0) target = $region21
  $region20: #{critic_forward.1} parent=0 // pred_region
    _
  $region21: #{critic_forward.1} parent=0 // pred_fallthru
    _
  // Predicated region
  $region22: #{critic_forward.1} parent=0 // pred_check
    _
  $region23: #{critic_forward.1} parent=0 // pred_check_branch
    %29 = sbr.rel (0) target = $region25
  $region24: #{critic_forward.1} parent=0 // pred_region
    _
  $region25: #{critic_forward.1} parent=0 // pred_fallthru
    _
  // Predicated region
  $region26: #{critic_forward.1} parent=0 // pred_check
    _
  $region27: #{critic_forward.1} parent=0 // pred_check_branch
    %31 = sbr.rel (0) target = $region29
  $region28: #{critic_forward.1} parent=0 // pred_region
    _
  $region29: #{critic_forward.1} parent=0 // pred_fallthru
    _
  // Predicated region
  $region30: #{critic_forward.1} parent=0 // pred_check
    _
  $region31: #{critic_forward.1} parent=0 // pred_check_branch
    %33 = sbr.rel (0) target = $region33
  $region32: #{critic_forward.1} parent=0 // pred_region
    _
  $region33: #{critic_forward.1} parent=0 // pred_fallthru
    _
  %v34 = vld [vmem:[%s0] sm:$0xff]
  %v35 = vld [vmem:[%s0 + $0x8] sm:$0xff]
  %v36 = vld [vmem:[%s0 + $0x10] sm:$0xff]
  %v37 = vld [vmem:[%s0 + $0x18] sm:$0xff]
  %v38 = vld [vmem:[%s0 + $0x20] sm:$0xff]
  %v39 = vld [vmem:[%s0 + $0x28] sm:$0xff]
  %v40 = vld [vmem:[%s0 + $0x30] sm:$0xff]
  %v41 = vld [vmem:[%s0 + $0x38] sm:$0xff]
  %v42 = vld [vmem:[%s3] sm:$0xff]
  %v43 = vld [vmem:[%s3 + $0x8] sm:$0xff]
  %v44 = vld [vmem:[%s5] sm:$0x1]
  %v46 = vperm.slane %v44, 0
  %vm48 = vcmask 130048
  %v50 = vsel %vm48, %v34, 0
  %v53 = vsel %vm48, %v35, 0
  %v56 = vsel %vm48, %v36, 0
  %v59 = vsel %vm48, %v37, 0
  %v62 = vsel %vm48, %v38, 0
  %v65 = vsel %vm48, %v39, 0
  %v68 = vsel %vm48, %v40, 0
  %v71 = vsel %vm48, %v41, 0
  %73 = vmatpush.msra.mxu0 0.0
  %74 = vmatpush.msra.mxu0 0.0
  %75 = vmatpush.msra.mxu0 0.0
  %76 = vmatpush.msra.mxu0 0.0
  %77 = vmatpush.msra.mxu0 0.0
  %78 = vmatpush.msra.mxu0 0.0
  %79 = vmatpush.msra.mxu0 0.0
  %80 = vmatpush.msra.mxu0 0.0
  %81 = vmatpush.msra.mxu0 0.0
  %82 = vmatpush.msra.mxu0 0.0
  %83 = vmatpush.msra.mxu0 0.0
  %84 = vmatpush.msra.mxu0 0.0
  %85 = vmatpush.msra.mxu0 0.0
  %86 = vmatpush.msra.mxu0 0.0
  %87 = vmatpush.msra.mxu0 %v43
  %88 = vmatpush.msra.mxu0 %v42
  %89 = vmatmul.f32.gmra.mxu0 %v50
  %v90 = vpop.f32.mrf.mxu0
  %v91 = vadd.f32 %v46, %v90
  %92 = vmatmul.f32.gmra.mxu0 %v53
  %v93 = vpop.f32.mrf.mxu0
  %v94 = vadd.f32 %v46, %v93
  %95 = vmatmul.f32.gmra.mxu0 %v56
  %v96 = vpop.f32.mrf.mxu0
  %v97 = vadd.f32 %v46, %v96
  %98 = vmatmul.f32.gmra.mxu0 %v59
  %v99 = vpop.f32.mrf.mxu0
  %v100 = vadd.f32 %v46, %v99
  %101 = vmatmul.f32.gmra.mxu0 %v62
  %v102 = vpop.f32.mrf.mxu0
  %v103 = vadd.f32 %v46, %v102
  %104 = vmatmul.f32.gmra.mxu0 %v65
  %v105 = vpop.f32.mrf.mxu0
  %v106 = vadd.f32 %v46, %v105
  %107 = vmatmul.f32.gmra.mxu0 %v68
  %v108 = vpop.f32.mrf.mxu0
  %v109 = vadd.f32 %v46, %v108
  %110 = vmatmul.f32.gmra.mxu0 %v71
  %v111 = vpop.f32.mrf.mxu0
  %v112 = vadd.f32 %v46, %v111
  %113 = vdwg.mxu0
  %v114 = vld [vmem:[%s4] sm:$0xff]
  %v115 = vld [vmem:[%s4 + $0x8] sm:$0xff]
  %v116 = vld [vmem:[%s4 + $0x10] sm:$0xff]
  %v117 = vld [vmem:[%s4 + $0x18] sm:$0xff]
  %v118 = vld [vmem:[%s6] sm:$0x1]
  %v119 = vld [vmem:[#allocation2] sm:$0x1]
  %v120 = vlaneseq
  %v121 = vand.u32 %v120, 127
  %v122 = vld [vmem:[%s1] sm:$0xff]
  %v123 = vld [vmem:[%s2] sm:$0xff]
  %vm124 = vcmask 261120
  %v126 = vsel %vm124, %v122, 0
  %128 = vmatpush.msra.mxu0 0.0
  %129 = vmatpush.msra.mxu0 0.0
  %130 = vmatpush.msra.mxu0 0.0
  %131 = vmatpush.msra.mxu0 0.0
  %132 = vmatpush.msra.mxu0 0.0
  %133 = vmatpush.msra.mxu0 0.0
  %134 = vmatpush.msra.mxu0 0.0
  %135 = vmatpush.msra.mxu0 0.0
  %136 = vmatpush.msra.mxu0 0.0
  %137 = vmatpush.msra.mxu0 0.0
  %138 = vmatpush.msra.mxu0 0.0
  %139 = vmatpush.msra.mxu0 0.0
  %140 = vmatpush.msra.mxu0 %v117
  %141 = vmatpush.msra.mxu0 %v116
  %142 = vmatpush.msra.mxu0 %v115
  %143 = vmatpush.msra.mxu0 %v114
  %144 = vmatmul.f32.gmra.mxu0 %v126
  %v145 = vpop.f32.mrf.mxu0
  %v146 = vadd.f32 0.0, %v145
  %147 = vdwg.mxu0
  %v148 = vadd.f32 %v91, %v146
  %v149 = vtanh.pop %v148
  %v150 = vmul.f32 %v149, 0.5
  %v151 = vadd.f32 %v150, 0.5
  %153 = vrot.lane.b32.xlu0 %v123, 32
  %v154 = vpop.permute.xlu0 %153
  %v156 = vmul.f32 %v151, %v154
  %158 = vrot.lane.b32.xlu0 %v149, 64
  %v159 = vpop.permute.xlu0 %158
  %v161 = vmul.f32 %v151, %v159
  %163 = vrot.lane.b32.xlu0 %v161, 32
  %v164 = vpop.permute.xlu0 %163
  %v166 = vadd.f32 %v156, %v164
  %v167 = vtanh.pop %v166
  %169 = vrot.lane.b32.xlu0 %v167, 64
  %v170 = vpop.permute.xlu0 %169
  %v172 = vmul.f32 %v151, %v170
  %v174 = vperm.slane %v118, 0
  %175 = vrot.lane.b32.xlu0 %v174, 96
  %v176 = vpop.permute.xlu0 %175
  %v178 = vmul.f32 %v172, %v176
  %180 = vrot.lane.b32.xlu0 %v178, 32
  %v181 = vpop.permute.xlu0 %180
  %v183 = vsel %vm124, %v181, 0.0
  %184 = vadd.xlane.f32.xlu0 %v183
  %v185 = vpop.xlane.xlu0 %184
  %v187 = vperm.slane %v119, 0
  %v189 = vadd.f32 %v185, %v187
  %vm190 = vcmp.eq.s32.totalorder %v121, 0
  %v191 = vsel %vm190, 1, 0
  %vm192 = vcmp.eq.s32.totalorder %v191, 1
  %194 = vset.pattern.permute.xlu0 0
  %195 = vperm.xlu0 %194, %v189
  %v196 = vpop.permute.xlu0 %195
  %v198 = vsel %vm192, %v196, 0.0
  %200 = vrot.lane.b32.xlu0 %v172, 32
  %v201 = vpop.permute.xlu0 %200
  %v202 = vsel %vm124, %v201, 0
  %204 = vmatpush.msra.mxu0 0.0
  %205 = vmatpush.msra.mxu0 0.0
  %206 = vmatpush.msra.mxu0 0.0
  %207 = vmatpush.msra.mxu0 0.0
  %208 = vmatpush.msra.mxu0 0.0
  %209 = vmatpush.msra.mxu0 0.0
  %210 = vmatpush.msra.mxu0 0.0
  %211 = vmatpush.msra.mxu0 0.0
  %212 = vmatpush.msra.mxu0 0.0
  %213 = vmatpush.msra.mxu0 0.0
  %214 = vmatpush.msra.mxu0 0.0
  %215 = vmatpush.msra.mxu0 0.0
  %216 = vmatpush.msra.mxu0 %v117
  %217 = vmatpush.msra.mxu0 %v116
  %218 = vmatpush.msra.mxu0 %v115
  %219 = vmatpush.msra.mxu0 %v114
  %220 = vmatmul.f32.gmra.mxu0 %v202
  %v221 = vpop.f32.mrf.mxu0
  %v222 = vadd.f32 0.0, %v221
  %223 = vdwg.mxu0
  %v224 = vadd.f32 %v94, %v222
  %v225 = vtanh.pop %v224
  %v226 = vmul.f32 %v225, 0.5
  %v227 = vadd.f32 %v226, 0.5
  %v228 = vmul.f32 %v227, %v166
  %230 = vrot.lane.b32.xlu0 %v225, 64
  %v231 = vpop.permute.xlu0 %230
  %v233 = vmul.f32 %v227, %v231
  %235 = vrot.lane.b32.xlu0 %v233, 32
  %v236 = vpop.permute.xlu0 %235
  %v238 = vadd.f32 %v228, %v236
  %v239 = vtanh.pop %v238
  %241 = vrot.lane.b32.xlu0 %v239, 64
  %v242 = vpop.permute.xlu0 %241
  %v244 = vmul.f32 %v227, %v242
  %v245 = vmul.f32 %v244, %v176
  %247 = vrot.lane.b32.xlu0 %v245, 32
  %v248 = vpop.permute.xlu0 %247
  %v250 = vsel %vm124, %v248, 0.0
  %251 = vadd.xlane.f32.xlu0 %v250
  %v252 = vpop.xlane.xlu0 %251
  %v253 = vadd.f32 %v252, %v187
  %vm254 = vcmp.eq.s32.totalorder %v121, 1
  %v255 = vsel %vm254, 1, 0
  %vm256 = vcmp.eq.s32.totalorder %v255, 1
  %258 = vset.pattern.permute.xlu0 0
  %259 = vperm.xlu0 %258, %v253
  %v260 = vpop.permute.xlu0 %259
  %v262 = vsel %vm256, %v260, %v198
  %264 = vrot.lane.b32.xlu0 %v244, 32
  %v265 = vpop.permute.xlu0 %264
  %v266 = vsel %vm124, %v265, 0
  %268 = vmatpush.msra.mxu0 0.0
  %269 = vmatpush.msra.mxu0 0.0
  %270 = vmatpush.msra.mxu0 0.0
  %271 = vmatpush.msra.mxu0 0.0
  %272 = vmatpush.msra.mxu0 0.0
  %273 = vmatpush.msra.mxu0 0.0
  %274 = vmatpush.msra.mxu0 0.0
  %275 = vmatpush.msra.mxu0 0.0
  %276 = vmatpush.msra.mxu0 0.0
  %277 = vmatpush.msra.mxu0 0.0
  %278 = vmatpush.msra.mxu0 0.0
  %279 = vmatpush.msra.mxu0 0.0
  %280 = vmatpush.msra.mxu0 %v117
  %281 = vmatpush.msra.mxu0 %v116
  %282 = vmatpush.msra.mxu0 %v115
  %283 = vmatpush.msra.mxu0 %v114
  %284 = vmatmul.f32.gmra.mxu0 %v266
  %v285 = vpop.f32.mrf.mxu0
  %v286 = vadd.f32 0.0, %v285
  %287 = vdwg.mxu0
  %v288 = vadd.f32 %v97, %v286
  %v289 = vtanh.pop %v288
  %v290 = vmul.f32 %v289, 0.5
  %v291 = vadd.f32 %v290, 0.5
  %v292 = vmul.f32 %v291, %v238
  %294 = vrot.lane.b32.xlu0 %v289, 64
  %v295 = vpop.permute.xlu0 %294
  %v297 = vmul.f32 %v291, %v295
  %299 = vrot.lane.b32.xlu0 %v297, 32
  %v300 = vpop.permute.xlu0 %299
  %v302 = vadd.f32 %v292, %v300
  %v303 = vtanh.pop %v302
  %305 = vrot.lane.b32.xlu0 %v303, 64
  %v306 = vpop.permute.xlu0 %305
  %v308 = vmul.f32 %v291, %v306
  %v309 = vmul.f32 %v308, %v176
  %311 = vrot.lane.b32.xlu0 %v309, 32
  %v312 = vpop.permute.xlu0 %311
  %v314 = vsel %vm124, %v312, 0.0
  %315 = vadd.xlane.f32.xlu0 %v314
  %v316 = vpop.xlane.xlu0 %315
  %v317 = vadd.f32 %v316, %v187
  %vm318 = vcmp.eq.s32.totalorder %v121, 2
  %v319 = vsel %vm318, 1, 0
  %vm320 = vcmp.eq.s32.totalorder %v319, 1
  %322 = vset.pattern.permute.xlu0 0
  %323 = vperm.xlu0 %322, %v317
  %v324 = vpop.permute.xlu0 %323
  %v326 = vsel %vm320, %v324, %v262
  %328 = vrot.lane.b32.xlu0 %v308, 32
  %v329 = vpop.permute.xlu0 %328
  %v330 = vsel %vm124, %v329, 0
  %332 = vmatpush.msra.mxu0 0.0
  %333 = vmatpush.msra.mxu0 0.0
  %334 = vmatpush.msra.mxu0 0.0
  %335 = vmatpush.msra.mxu0 0.0
  %336 = vmatpush.msra.mxu0 0.0
  %337 = vmatpush.msra.mxu0 0.0
  %338 = vmatpush.msra.mxu0 0.0
  %339 = vmatpush.msra.mxu0 0.0
  %340 = vmatpush.msra.mxu0 0.0
  %341 = vmatpush.msra.mxu0 0.0
  %342 = vmatpush.msra.mxu0 0.0
  %343 = vmatpush.msra.mxu0 0.0
  %344 = vmatpush.msra.mxu0 %v117
  %345 = vmatpush.msra.mxu0 %v116
  %346 = vmatpush.msra.mxu0 %v115
  %347 = vmatpush.msra.mxu0 %v114
  %348 = vmatmul.f32.gmra.mxu0 %v330
  %v349 = vpop.f32.mrf.mxu0
  %v350 = vadd.f32 0.0, %v349
  %351 = vdwg.mxu0
  %v352 = vadd.f32 %v100, %v350
  %v353 = vtanh.pop %v352
  %v354 = vmul.f32 %v353, 0.5
  %v355 = vadd.f32 %v354, 0.5
  %v356 = vmul.f32 %v355, %v302
  %358 = vrot.lane.b32.xlu0 %v353, 64
  %v359 = vpop.permute.xlu0 %358
  %v361 = vmul.f32 %v355, %v359
  %363 = vrot.lane.b32.xlu0 %v361, 32
  %v364 = vpop.permute.xlu0 %363
  %v366 = vadd.f32 %v356, %v364
  %v367 = vtanh.pop %v366
  %369 = vrot.lane.b32.xlu0 %v367, 64
  %v370 = vpop.permute.xlu0 %369
  %v372 = vmul.f32 %v355, %v370
  %v373 = vmul.f32 %v372, %v176
  %375 = vrot.lane.b32.xlu0 %v373, 32
  %v376 = vpop.permute.xlu0 %375
  %v378 = vsel %vm124, %v376, 0.0
  %379 = vadd.xlane.f32.xlu0 %v378
  %v380 = vpop.xlane.xlu0 %379
  %v381 = vadd.f32 %v380, %v187
  %vm382 = vcmp.eq.s32.totalorder %v121, 3
  %v383 = vsel %vm382, 1, 0
  %vm384 = vcmp.eq.s32.totalorder %v383, 1
  %386 = vset.pattern.permute.xlu0 0
  %387 = vperm.xlu0 %386, %v381
  %v388 = vpop.permute.xlu0 %387
  %v390 = vsel %vm384, %v388, %v326
  %392 = vrot.lane.b32.xlu0 %v372, 32
  %v393 = vpop.permute.xlu0 %392
  %v394 = vsel %vm124, %v393, 0
  %396 = vmatpush.msra.mxu0 0.0
  %397 = vmatpush.msra.mxu0 0.0
  %398 = vmatpush.msra.mxu0 0.0
  %399 = vmatpush.msra.mxu0 0.0
  %400 = vmatpush.msra.mxu0 0.0
  %401 = vmatpush.msra.mxu0 0.0
  %402 = vmatpush.msra.mxu0 0.0
  %403 = vmatpush.msra.mxu0 0.0
  %404 = vmatpush.msra.mxu0 0.0
  %405 = vmatpush.msra.mxu0 0.0
  %406 = vmatpush.msra.mxu0 0.0
  %407 = vmatpush.msra.mxu0 0.0
  %408 = vmatpush.msra.mxu0 %v117
  %409 = vmatpush.msra.mxu0 %v116
  %410 = vmatpush.msra.mxu0 %v115
  %411 = vmatpush.msra.mxu0 %v114
  %412 = vmatmul.f32.gmra.mxu0 %v394
  %v413 = vpop.f32.mrf.mxu0
  %v414 = vadd.f32 0.0, %v413
  %415 = vdwg.mxu0
  %v416 = vadd.f32 %v103, %v414
  %v417 = vtanh.pop %v416
  %v418 = vmul.f32 %v417, 0.5
  %v419 = vadd.f32 %v418, 0.5
  %v420 = vmul.f32 %v419, %v366
  %422 = vrot.lane.b32.xlu0 %v417, 64
  %v423 = vpop.permute.xlu0 %422
  %v425 = vmul.f32 %v419, %v423
  %427 = vrot.lane.b32.xlu0 %v425, 32
  %v428 = vpop.permute.xlu0 %427
  %v430 = vadd.f32 %v420, %v428
  %v431 = vtanh.pop %v430
  %433 = vrot.lane.b32.xlu0 %v431, 64
  %v434 = vpop.permute.xlu0 %433
  %v436 = vmul.f32 %v419, %v434
  %v437 = vmul.f32 %v436, %v176
  %439 = vrot.lane.b32.xlu0 %v437, 32
  %v440 = vpop.permute.xlu0 %439
  %v442 = vsel %vm124, %v440, 0.0
  %443 = vadd.xlane.f32.xlu0 %v442
  %v444 = vpop.xlane.xlu0 %443
  %v445 = vadd.f32 %v444, %v187
  %vm446 = vcmp.eq.s32.totalorder %v121, 4
  %v447 = vsel %vm446, 1, 0
  %vm448 = vcmp.eq.s32.totalorder %v447, 1
  %450 = vset.pattern.permute.xlu0 0
  %451 = vperm.xlu0 %450, %v445
  %v452 = vpop.permute.xlu0 %451
  %v454 = vsel %vm448, %v452, %v390
  %456 = vrot.lane.b32.xlu0 %v436, 32
  %v457 = vpop.permute.xlu0 %456
  %v458 = vsel %vm124, %v457, 0
  %460 = vmatpush.msra.mxu0 0.0
  %461 = vmatpush.msra.mxu0 0.0
  %462 = vmatpush.msra.mxu0 0.0
  %463 = vmatpush.msra.mxu0 0.0
  %464 = vmatpush.msra.mxu0 0.0
  %465 = vmatpush.msra.mxu0 0.0
  %466 = vmatpush.msra.mxu0 0.0
  %467 = vmatpush.msra.mxu0 0.0
  %468 = vmatpush.msra.mxu0 0.0
  %469 = vmatpush.msra.mxu0 0.0
  %470 = vmatpush.msra.mxu0 0.0
  %471 = vmatpush.msra.mxu0 0.0
  %472 = vmatpush.msra.mxu0 %v117
  %473 = vmatpush.msra.mxu0 %v116
  %474 = vmatpush.msra.mxu0 %v115
  %475 = vmatpush.msra.mxu0 %v114
  %476 = vmatmul.f32.gmra.mxu0 %v458
  %v477 = vpop.f32.mrf.mxu0
  %v478 = vadd.f32 0.0, %v477
  %479 = vdwg.mxu0
  %v480 = vadd.f32 %v106, %v478
  %v481 = vtanh.pop %v480
  %v482 = vmul.f32 %v481, 0.5
  %v483 = vadd.f32 %v482, 0.5
  %v484 = vmul.f32 %v483, %v430
  %486 = vrot.lane.b32.xlu0 %v481, 64
  %v487 = vpop.permute.xlu0 %486
  %v489 = vmul.f32 %v483, %v487
  %491 = vrot.lane.b32.xlu0 %v489, 32
  %v492 = vpop.permute.xlu0 %491
  %v494 = vadd.f32 %v484, %v492
  %v495 = vtanh.pop %v494
  %497 = vrot.lane.b32.xlu0 %v495, 64
  %v498 = vpop.permute.xlu0 %497
  %v500 = vmul.f32 %v483, %v498
  %v501 = vmul.f32 %v500, %v176
  %503 = vrot.lane.b32.xlu0 %v501, 32
  %v504 = vpop.permute.xlu0 %503
  %v506 = vsel %vm124, %v504, 0.0
  %507 = vadd.xlane.f32.xlu0 %v506
  %v508 = vpop.xlane.xlu0 %507
  %v509 = vadd.f32 %v508, %v187
  %vm510 = vcmp.eq.s32.totalorder %v121, 5
  %v511 = vsel %vm510, 1, 0
  %vm512 = vcmp.eq.s32.totalorder %v511, 1
  %514 = vset.pattern.permute.xlu0 0
  %515 = vperm.xlu0 %514, %v509
  %v516 = vpop.permute.xlu0 %515
  %v518 = vsel %vm512, %v516, %v454
  %520 = vrot.lane.b32.xlu0 %v500, 32
  %v521 = vpop.permute.xlu0 %520
  %v522 = vsel %vm124, %v521, 0
  %524 = vmatpush.msra.mxu0 0.0
  %525 = vmatpush.msra.mxu0 0.0
  %526 = vmatpush.msra.mxu0 0.0
  %527 = vmatpush.msra.mxu0 0.0
  %528 = vmatpush.msra.mxu0 0.0
  %529 = vmatpush.msra.mxu0 0.0
  %530 = vmatpush.msra.mxu0 0.0
  %531 = vmatpush.msra.mxu0 0.0
  %532 = vmatpush.msra.mxu0 0.0
  %533 = vmatpush.msra.mxu0 0.0
  %534 = vmatpush.msra.mxu0 0.0
  %535 = vmatpush.msra.mxu0 0.0
  %536 = vmatpush.msra.mxu0 %v117
  %537 = vmatpush.msra.mxu0 %v116
  %538 = vmatpush.msra.mxu0 %v115
  %539 = vmatpush.msra.mxu0 %v114
  %540 = vmatmul.f32.gmra.mxu0 %v522
  %v541 = vpop.f32.mrf.mxu0
  %v542 = vadd.f32 0.0, %v541
  %543 = vdwg.mxu0
  %v544 = vadd.f32 %v109, %v542
  %v545 = vtanh.pop %v544
  %v546 = vmul.f32 %v545, 0.5
  %v547 = vadd.f32 %v546, 0.5
  %v548 = vmul.f32 %v547, %v494
  %550 = vrot.lane.b32.xlu0 %v545, 64
  %v551 = vpop.permute.xlu0 %550
  %v553 = vmul.f32 %v547, %v551
  %555 = vrot.lane.b32.xlu0 %v553, 32
  %v556 = vpop.permute.xlu0 %555
  %v558 = vadd.f32 %v548, %v556
  %v559 = vtanh.pop %v558
  %561 = vrot.lane.b32.xlu0 %v559, 64
  %v562 = vpop.permute.xlu0 %561
  %v564 = vmul.f32 %v547, %v562
  %v565 = vmul.f32 %v564, %v176
  %567 = vrot.lane.b32.xlu0 %v565, 32
  %v568 = vpop.permute.xlu0 %567
  %v570 = vsel %vm124, %v568, 0.0
  %571 = vadd.xlane.f32.xlu0 %v570
  %v572 = vpop.xlane.xlu0 %571
  %v573 = vadd.f32 %v572, %v187
  %vm574 = vcmp.eq.s32.totalorder %v121, 6
  %v575 = vsel %vm574, 1, 0
  %vm576 = vcmp.eq.s32.totalorder %v575, 1
  %578 = vset.pattern.permute.xlu0 0
  %579 = vperm.xlu0 %578, %v573
  %v580 = vpop.permute.xlu0 %579
  %v582 = vsel %vm576, %v580, %v518
  %584 = vrot.lane.b32.xlu0 %v564, 32
  %v585 = vpop.permute.xlu0 %584
  %v586 = vsel %vm124, %v585, 0
  %588 = vmatpush.msra.mxu0 0.0
  %589 = vmatpush.msra.mxu0 0.0
  %590 = vmatpush.msra.mxu0 0.0
  %591 = vmatpush.msra.mxu0 0.0
  %592 = vmatpush.msra.mxu0 0.0
  %593 = vmatpush.msra.mxu0 0.0
  %594 = vmatpush.msra.mxu0 0.0
  %595 = vmatpush.msra.mxu0 0.0
  %596 = vmatpush.msra.mxu0 0.0
  %597 = vmatpush.msra.mxu0 0.0
  %598 = vmatpush.msra.mxu0 0.0
  %599 = vmatpush.msra.mxu0 0.0
  %600 = vmatpush.msra.mxu0 %v117
  %601 = vmatpush.msra.mxu0 %v116
  %602 = vmatpush.msra.mxu0 %v115
  %603 = vmatpush.msra.mxu0 %v114
  %604 = vmatmul.f32.gmra.mxu0 %v586
  %v605 = vpop.f32.mrf.mxu0
  %v606 = vadd.f32 0.0, %v605
  %607 = vdwg.mxu0
  %v608 = vadd.f32 %v112, %v606
  %v609 = vtanh.pop %v608
  %v610 = vmul.f32 %v609, 0.5
  %v611 = vadd.f32 %v610, 0.5
  %v612 = vmul.f32 %v611, %v558
  %614 = vrot.lane.b32.xlu0 %v609, 64
  %v615 = vpop.permute.xlu0 %614
  %v617 = vmul.f32 %v611, %v615
  %619 = vrot.lane.b32.xlu0 %v617, 32
  %v620 = vpop.permute.xlu0 %619
  %v622 = vadd.f32 %v612, %v620
  %v623 = vtanh.pop %v622
  %625 = vrot.lane.b32.xlu0 %v623, 64
  %v626 = vpop.permute.xlu0 %625
  %v628 = vmul.f32 %v611, %v626
  %v629 = vmul.f32 %v628, %v176
  %631 = vrot.lane.b32.xlu0 %v629, 32
  %v632 = vpop.permute.xlu0 %631
  %v634 = vsel %vm124, %v632, 0.0
  %635 = vadd.xlane.f32.xlu0 %v634
  %v636 = vpop.xlane.xlu0 %635
  %v637 = vadd.f32 %v636, %v187
  %vm638 = vcmp.eq.s32.totalorder %v121, 7
  %v639 = vsel %vm638, 1, 0
  %vm640 = vcmp.eq.s32.totalorder %v639, 1
  %642 = vset.pattern.permute.xlu0 0
  %643 = vperm.xlu0 %642, %v637
  %v644 = vpop.permute.xlu0 %643
  %v646 = vsel %vm640, %v644, %v582
  %vm647 = vcmask 64512
  %648 = vst.msk [vmem:[%s8] sm:$0xff] %vm647, %v646
  %650 = vrot.lane.b32.xlu0 %v628, 32
  %v651 = vpop.permute.xlu0 %650
  %653 = vst.msk [vmem:[%s9] sm:$0xff] %vm124, %v651
  %655 = vrot.lane.b32.xlu0 %v622, 96
  %v656 = vpop.permute.xlu0 %655
  %658 = vst.msk [vmem:[%s10] sm:$0xff] %vm124, %v656
  // Predicated region
  $region34: #{critic_forward.1} parent=0 // pred_check
    _
  $region35: #{critic_forward.1} parent=0 // pred_check_branch
    %660 = sbr.rel (0) target = $region37
  $region36: #{critic_forward.1} parent=0 // pred_region
    _
  $region37: #{critic_forward.1} parent=0 // pred_fallthru
    _
  // Predicated region
  $region38: #{critic_forward.1} parent=0 // pred_check
    _
  $region39: #{critic_forward.1} parent=0 // pred_check_branch
    %662 = sbr.rel (0) target = $region41
  $region40: #{critic_forward.1} parent=0 // pred_region
    _
  $region41: #{critic_forward.1} parent=0 // pred_fallthru
    _
  // Predicated region
  $region42: #{critic_forward.1} parent=0 // pred_check
    _
  $region43: #{critic_forward.1} parent=0 // pred_check_branch
    %664 = sbr.rel (0) target = $region45
  $region44: #{critic_forward.1} parent=0 // pred_region
    _
  $region45: #{critic_forward.1} parent=0 // pred_fallthru
    _
  // Predicated region
  $region46: #{critic_forward.1} parent=0 // pred_check
    _
  $region47: #{critic_forward.1} parent=0 // pred_check_branch
    %666 = sbr.rel (0) target = $region49
  $region48: #{critic_forward.1} parent=0 // pred_region
    _
  $region49: #{critic_forward.1} parent=0 // pred_fallthru
    _
  // Predicated region
  $region50: #{critic_forward.1} parent=0 // pred_check
    _
  $region51: #{critic_forward.1} parent=0 // pred_check_branch
    %668 = sbr.rel (0) target = $region53
  $region52: #{critic_forward.1} parent=0 // pred_region
    _
  $region53: #{critic_forward.1} parent=0 // pred_fallthru
    _
  // Predicated region
  $region54: #{critic_forward.1} parent=0 // pred_check
    _
  $region55: #{critic_forward.1} parent=0 // pred_check_branch
    %670 = sbr.rel (0) target = $region57
  $region56: #{critic_forward.1} parent=0 // pred_region
    _
  $region57: #{critic_forward.1} parent=0 // pred_fallthru
    _

</llo_original>
